<compile_context>
chip_gen: v6e
topology: v6e:2x2x1
jax: 0.10.0
libtpu: 0.0.40
codegen_flags: <defaults>
</compile_context>

<pallas_src>
import jax
import jax.numpy as jnp
from jax.experimental import pallas as pl
from jax.experimental.pallas import tpu as pltpu

_MAX_LANES = 1024        # preferred lane-dense last dim (multiple of 128)
_MAX_TILE_ROWS = 512     # 512 x 1024 f32 block = 2 MiB -> pipelines well on v5e/v6e/v7x


def _vq9_kernel(q_ref, o_ref):
    # Compute in f32 regardless of input dtype (v5e has no bf16 VPU/EUP path).
    q = q_ref[...].astype(jnp.float32)
    # Keep torch semantics exactly: q * 3.5897 / q + q  -> NaN at q == 0.
    o_ref[...] = jnp.cos(q * 3.5897 / q + q).astype(o_ref.dtype)


def _pick_lanes(n):
    """Largest lane width (multiple of 128, <= 1024) dividing n; else pad."""
    for lanes in (1024, 512, 256, 128):
        if n % lanes == 0:
            return lanes, False
    return _MAX_LANES, True


def vq9_forward(q):
    """Elementwise cos(q*3.5897/q + q) via a tiled, lane-dense Pallas TPU kernel.

    q: any-shaped float array (e.g. NCHW). Returns array of same shape/dtype.
    """
    orig_shape = q.shape
    orig_dtype = q.dtype
    n = q.size

    if n == 0:
        return q

    if n < 128:
        # Tiny input: one full-array block of shape (1, n); masked stores are
        # irrelevant at this size.
        lanes, need_pad = n, False
    else:
        lanes, need_pad = _pick_lanes(n)

    rows = pl.cdiv(n, lanes)
    flat = q.reshape(-1)
    if need_pad:
        # Zero padding -> 0*3.5897/0 = NaN inside the kernel; sliced off below.
        flat = jnp.pad(flat, (0, rows * lanes - n))
    q2 = flat.reshape(rows, lanes)

    # Row tile: whole array in one block when small (full-dim exception to the
    # (8,128) rule), otherwise a (512, lanes) block; partial boundary blocks
    # are masked by Pallas.
    tile_r = rows if rows <= _MAX_TILE_ROWS else _MAX_TILE_ROWS
    grid = (pl.cdiv(rows, tile_r),)

    out = pl.pallas_call(
        _vq9_kernel,
        out_shape=jax.ShapeDtypeStruct((rows, lanes), orig_dtype),
        grid=grid,
        in_specs=[pl.BlockSpec((tile_r, lanes), lambda i: (i, 0))],
        out_specs=pl.BlockSpec((tile_r, lanes), lambda i: (i, 0)),
        compiler_params=pltpu.CompilerParams(
            dimension_semantics=("parallel",),
        ),
    )(q2)

    if need_pad:
        return out.reshape(-1)[:n].reshape(orig_shape)
    return out.reshape(orig_shape)


if __name__ == "__main__":
    key = jax.random.PRNGKey(0)
    # Shape consistent with an NCHW tensor fed to the module.
    x = jax.random.normal(key, (2, 4, 16, 16), dtype=jnp.float32)

    y = vq9_forward(x)
    jax.block_until_ready(y)

    # Sanity check against plain-JAX reference.
    ref = jnp.cos(x * 3.5897 / x + x)
    assert y.shape == x.shape and y.dtype == x.dtype
    assert jnp.allclose(y, ref, atol=1e-5, rtol=1e-5), "mismatch vs reference"

    print("KERNEL_OK")
</pallas_src>

<mosaic_0001>
module attributes {stable_mosaic.version = 11 : i64} {
  func.func @_vq9_kernel(%arg0: i32, %arg1: memref<2x1024xf32, #tpu.memory_space<vmem>>, %arg2: memref<2x1024xf32, #tpu.memory_space<vmem>>) attributes {dimension_semantics = [#tpu.dimension_semantics<parallel>], iteration_bounds = array<i64: 1>, scalar_prefetch = 0 : i64, scratch_operands = 0 : i64, tpu.core_type = #tpu.core_type<tc>, window_params = [{transform_indices = @transform_0, window_bounds = array<i64: 2, 1024>}, {transform_indices = @transform_1, window_bounds = array<i64: 2, 1024>}]} {
    %c0 = arith.constant 0 : index
    %c0_0 = arith.constant 0 : index
    %0 = vector.load %arg1[%c0, %c0_0] : memref<2x1024xf32, #tpu.memory_space<vmem>>, vector<2x1024xf32>
    %cst = arith.constant 3.589700e+00 : f32
    %1 = vector.broadcast %cst : f32 to vector<2x1024xf32>
    %2 = arith.mulf %0, %1 : vector<2x1024xf32>
    %3 = arith.divf %2, %0 : vector<2x1024xf32>
    %4 = arith.addf %3, %0 : vector<2x1024xf32>
    %5 = math.cos %4 : vector<2x1024xf32>
    %c0_1 = arith.constant 0 : index
    %c0_2 = arith.constant 0 : index
    %6 = vector.load %arg2[%c0_1, %c0_2] : memref<2x1024xf32, #tpu.memory_space<vmem>>, vector<2x1024xf32>
    tpu.vector_store %arg2[%c0_1, %c0_2], %5 {strides = array<i32>} : memref<2x1024xf32, #tpu.memory_space<vmem>>, vector<2x1024xf32>,
    return
  }
  func.func @transform_0(%arg0: i32) -> (i32, i32) {
    %c0_i32 = arith.constant 0 : i32
    %c0_i32_0 = arith.constant 0 : i32
    return %arg0, %c0_i32 : i32, i32
  }
  func.func @transform_1(%arg0: i32) -> (i32, i32) {
    %c0_i32 = arith.constant 0 : i32
    %c0_i32_0 = arith.constant 0 : i32
    return %arg0, %c0_i32 : i32, i32
  }
}

</mosaic_0001>

<llo_original>
// kernel: tpu_custom_call.1
$region0: #{tpu_custom_call.1}
  #allocation0 [shape = 'u32[]', space=smem, size = 0x4, offset = 0x4, fixed_abs, tag = 'smem constant byte address 0x4 - core index']
  #allocation1 [shape = 'u32[144,128]{1,0:T(1,128)}', space=vmem, size = 0x12000, scoped, tag = 'internal scratch']
  %s0 = inlined_call_operand.hbm [shape: f32[2,1024], index: 0, kind: input, shape index: {}]
  %s1 = inlined_call_operand.hbm [shape: f32[2,1024], index: 1, kind: output, shape index: {}]
  %s2 = sld [smem:[#allocation0]]
  $region18: #{tpu_custom_call.1} parent=0
    _
  %s4 = ssub.s32 1, %s2
  %s5 = scalar_select 0, %s4, %s2
  $region1: #{tpu_custom_call.1} parent=0
    #allocation2 [shape = 'u8[8192]{0}', space=vmem, size = 0x2000, scoped, tag = 'input window, operand 0, single buffered']
    #allocation3 [shape = 's32[1]{0}', space=sflag, size = 0x4, scoped, tag = 'scoped memory for tpu_custom_call.1']
    #allocation4 [shape = 's32[1]{0}', space=sflag, size = 0x4, scoped, tag = 'scoped memory for tpu_custom_call.1']
    #allocation5 [shape = 'u8[8192]{0}', space=vmem, size = 0x2000, scoped, tag = 'output window, operand 0, single buffered']
    %6 = vsyncpa [#allocation3], 0
    %7 = vsyncpa [#allocation4], 0
    // Predicated region
    $region2: #{tpu_custom_call.1} parent=1 // pred_check
      _
    $region3: #{tpu_custom_call.1} parent=1 // pred_check_branch
      %9 = sbr.rel (0) target = $region5
    $region4: #{tpu_custom_call.1} parent=1 // pred_region
      %s11 = ssub.s32 256, 256
      %12 = vsyncadd [#allocation3], %s11
      %s14 = sshll.u32 [#allocation2], 4
      %s15 = int_to_ptr.vmem [resolvable:$true] %s14
      %17 = dma.hbm_to_vmem [thread:$0]  %s0, 256, %s15, [#allocation3]
    $region5: #{tpu_custom_call.1} parent=1 // pred_fallthru
      _
    // Predicated region
    $region6: #{tpu_custom_call.1} parent=1 // pred_check
      _
    $region7: #{tpu_custom_call.1} parent=1 // pred_check_branch
      %19 = sbr.rel (0) target = $region9
    $region8: #{tpu_custom_call.1} parent=1 // pred_region
      %20 = dma.done [#allocation3], 256
    $region9: #{tpu_custom_call.1} parent=1 // pred_fallthru
      _
    %v21 = vld [vmem:[#allocation2] sm:$0xff]
    %v22 = vld [vmem:[#allocation2 + $0x8] sm:$0xff]
    %v23 = vmul.f32 %v21, 3.5897
    %v24 = vmul.f32 %v22, 3.5897
    %v25 = vrcp.pop %v21
    %v26 = vmul.f32 %v23, %v25
    %v27 = vrcp.pop %v22
    %v28 = vmul.f32 %v24, %v27
    %v29 = vadd.f32 %v26, %v21
    %v30 = vadd.f32 %v28, %v22
    %v31 = vand.u32 2147483647, %v29
    %vm32 = vcmp.le.f32.partialorder %v31, 0.7853982
    %vm33 = vcmp.lt.s32.totalorder %v29, 0
    %v34 = vand.u32 %v29, 2139095040
    %v35 = vshrl.u32 %v34, 23
    %v36 = vsub.s32 %v35, 127
    %v37 = vand.u32 2147483647, %v29
    %v38 = vand.u32 %v37, 8388607
    %v39 = vor.u32 %v38, 8388608
    %v40 = vsub.s32 0, %v39
    %v41 = vadd.s32 %v36, 1
    %vm42 = vcmp.gt.s32.totalorder %v41, 0
    %v43 = vsel %vm42, %v41, 0
    %v44 = vshrl.u32 %v43, 5
    %v45 = vand.u32 %v43, 31
    %v46 = vsub.s32 32, %v45
    %v47 = vshrl.u32 683565275, %v46
    %v48 = vshll.u32 683565275, %v45
    %v49 = vshrl.u32 2475754826, %v46
    %v50 = vor.u32 %v48, %v49
    %v51 = vshll.u32 2475754826, %v45
    %v52 = vshrl.u32 2131351028, %v46
    %v53 = vor.u32 %v51, %v52
    %v54 = vshll.u32 2131351028, %v45
    %v55 = vshrl.u32 2102212464, %v46
    %v56 = vor.u32 %v54, %v55
    %v57 = vshll.u32 2102212464, %v45
    %v58 = vshrl.u32 920167782, %v46
    %v59 = vor.u32 %v57, %v58
    %v60 = vshll.u32 920167782, %v45
    %v61 = vshrl.u32 1326507024, %v46
    %v62 = vor.u32 %v60, %v61
    %vm63 = vcmp.lt.s32.totalorder %v44, 1
    %vm64 = vcmp.lt.s32.totalorder %v44, 2
    %vm65 = vcmp.lt.s32.totalorder %v44, 3
    %vm66 = vcmp.lt.s32.totalorder %v44, 4
    %v67 = vsel %vm63, %v47, %v50
    %v68 = vsel %vm66, %v56, 2102212464
    %v69 = vsel %vm65, %v53, %v68
    %v70 = vsel %vm64, %v67, %v69
    %v71 = vsel %vm63, %v50, %v53
    %v72 = vsel %vm66, %v59, 920167782
    %v73 = vsel %vm65, %v56, %v72
    %v74 = vsel %vm64, %v71, %v73
    %v75 = vsel %vm63, %v53, %v56
    %v76 = vsel %vm66, %v62, 1326507024
    %v77 = vsel %vm65, %v59, %v76
    %v78 = vsel %vm64, %v75, %v77
    %v79 = vshll.u32 %v39, 8
    %v80 = vmul.u32.u64.compose %v79, %v78
    %v81 = vextract.low.u32 %v80
    %v82 = vextract.high.u32 %v80
    %v83 = vmul.u32.u64.compose %v79, %v74
    %v84 = vextract.low.u32 %v83
    %v85 = vextract.high.u32 %v83
    %v86 = vmul.u32 %v79, %v70
    %v87 = vadd.s32 %v82, %v84
    %vm88 = vc.u32 %v82, %v84
    %v89 = vadd.s32 %v85, 1
    %v90 = vsel %vm88, %v89, %v85
    %v91 = vadd.s32 %v86, %v90
    %v92 = vadd.s32 %v91, 536870912
    %v93 = vshrl.u32 %v92, 30
    %v94 = vshll.u32 %v93, 30
    %v95 = vsub.s32 %v91, %v94
    %vm96 = vcmp.lt.s32.totalorder %v95, 0
    %v97 = vsub.s32 0, %v95
    %v98 = vsel %vm96, %v97, %v95
    %v99 = vclz %v98
    %v100 = vsub.s32 %v99, 2
    %vm101 = vcmp.gt.s32.totalorder 0, %v100
    %v102 = vsel %vm101, 0, %v100
    %v103 = vsub.s32 32, %v102
    %v104 = vshll.u32 %v95, %v102
    %v105 = vshrl.u32 %v87, %v103
    %v106 = vor.u32 %v104, %v105
    %v107 = vsub.s32 4294967266, %v102
    %v108 = vadd.s32 %v107, 127
    %v109 = vshll.u32 %v108, 23
    %v110 = vor.u32 4788187, %v109
    %v111 = vand.u32 2147483647, %v110
    %v113 = vcvt.s32.f32 %v106
    %v114 = vmul.f32 %v113, %v111
    %v115 = vxor.u32 %v114, 2147483648
    %v116 = vsel %vm33, %v115, %v114
    %v117 = vsub.s32 4, %v93
    %v118 = vsel %vm33, %v117, %v93
    %v119 = vsel %vm32, %v29, %v116
    %v120 = vsel %vm32, 0, %v118
    %v121 = vcosq.f32.pop %v119
    %v122 = vsinq.f32.pop %v119
    %vm123 = vweird.f32 %v29
    %v124 = vand.u32 %v120, 3
    %vm125 = vcmp.lt.s32.totalorder %v124, 2
    %vm126 = vcmp.eq.s32.totalorder %v124, 0
    %v127 = vxor.u32 %v122, 2147483648
    %v128 = vsel %vm126, %v121, %v127
    %vm129 = vcmp.eq.s32.totalorder %v124, 2
    %v130 = vxor.u32 %v121, 2147483648
    %v131 = vsel %vm129, %v130, %v122
    %v132 = vsel %vm125, %v128, %v131
    %v133 = vsel %vm123, nan, %v132
    %v134 = vand.u32 2147483647, %v30
    %vm135 = vcmp.le.f32.partialorder %v134, 0.7853982
    %vm136 = vcmp.lt.s32.totalorder %v30, 0
    %v137 = vand.u32 %v30, 2139095040
    %v138 = vshrl.u32 %v137, 23
    %v139 = vsub.s32 %v138, 127
    %v140 = vand.u32 2147483647, %v30
    %v141 = vand.u32 %v140, 8388607
    %v142 = vor.u32 %v141, 8388608
    %v143 = vsub.s32 0, %v142
    %v144 = vadd.s32 %v139, 1
    %vm145 = vcmp.gt.s32.totalorder %v144, 0
    %v146 = vsel %vm145, %v144, 0
    %v147 = vshrl.u32 %v146, 5
    %v148 = vand.u32 %v146, 31
    %v149 = vsub.s32 32, %v148
    %v150 = vshrl.u32 683565275, %v149
    %v151 = vshll.u32 683565275, %v148
    %v152 = vshrl.u32 2475754826, %v149
    %v153 = vor.u32 %v151, %v152
    %v154 = vshll.u32 2475754826, %v148
    %v155 = vshrl.u32 2131351028, %v149
    %v156 = vor.u32 %v154, %v155
    %v157 = vshll.u32 2131351028, %v148
    %v158 = vshrl.u32 2102212464, %v149
    %v159 = vor.u32 %v157, %v158
    %v160 = vshll.u32 2102212464, %v148
    %v161 = vshrl.u32 920167782, %v149
    %v162 = vor.u32 %v160, %v161
    %v163 = vshll.u32 920167782, %v148
    %v164 = vshrl.u32 1326507024, %v149
    %v165 = vor.u32 %v163, %v164
    %vm166 = vcmp.lt.s32.totalorder %v147, 1
    %vm167 = vcmp.lt.s32.totalorder %v147, 2
    %vm168 = vcmp.lt.s32.totalorder %v147, 3
    %vm169 = vcmp.lt.s32.totalorder %v147, 4
    %v170 = vsel %vm166, %v150, %v153
    %v171 = vsel %vm169, %v159, 2102212464
    %v172 = vsel %vm168, %v156, %v171
    %v173 = vsel %vm167, %v170, %v172
    %v174 = vsel %vm166, %v153, %v156
    %v175 = vsel %vm169, %v162, 920167782
    %v176 = vsel %vm168, %v159, %v175
    %v177 = vsel %vm167, %v174, %v176
    %v178 = vsel %vm166, %v156, %v159
    %v179 = vsel %vm169, %v165, 1326507024
    %v180 = vsel %vm168, %v162, %v179
    %v181 = vsel %vm167, %v178, %v180
    %v182 = vshll.u32 %v142, 8
    %v183 = vmul.u32.u64.compose %v182, %v181
    %v184 = vextract.low.u32 %v183
    %v185 = vextract.high.u32 %v183
    %v186 = vmul.u32.u64.compose %v182, %v177
    %v187 = vextract.low.u32 %v186
    %v188 = vextract.high.u32 %v186
    %v189 = vmul.u32 %v182, %v173
    %v190 = vadd.s32 %v185, %v187
    %vm191 = vc.u32 %v185, %v187
    %v192 = vadd.s32 %v188, 1
    %v193 = vsel %vm191, %v192, %v188
    %v194 = vadd.s32 %v189, %v193
    %v195 = vadd.s32 %v194, 536870912
    %v196 = vshrl.u32 %v195, 30
    %v197 = vshll.u32 %v196, 30
    %v198 = vsub.s32 %v194, %v197
    %vm199 = vcmp.lt.s32.totalorder %v198, 0
    %v200 = vsub.s32 0, %v198
    %v201 = vsel %vm199, %v200, %v198
    %v202 = vclz %v201
    %v203 = vsub.s32 %v202, 2
    %vm204 = vcmp.gt.s32.totalorder 0, %v203
    %v205 = vsel %vm204, 0, %v203
    %v206 = vsub.s32 32, %v205
    %v207 = vshll.u32 %v198, %v205
    %v208 = vshrl.u32 %v190, %v206
    %v209 = vor.u32 %v207, %v208
    %v210 = vsub.s32 4294967266, %v205
    %v211 = vadd.s32 %v210, 127
    %v212 = vshll.u32 %v211, 23
    %v213 = vor.u32 4788187, %v212
    %v214 = vand.u32 2147483647, %v213
    %v216 = vcvt.s32.f32 %v209
    %v217 = vmul.f32 %v216, %v214
    %v218 = vxor.u32 %v217, 2147483648
    %v219 = vsel %vm136, %v218, %v217
    %v220 = vsub.s32 4, %v196
    %v221 = vsel %vm136, %v220, %v196
    %v222 = vsel %vm135, %v30, %v219
    %v223 = vsel %vm135, 0, %v221
    %v224 = vcosq.f32.pop %v222
    %v225 = vsinq.f32.pop %v222
    %vm226 = vweird.f32 %v30
    %v227 = vand.u32 %v223, 3
    %vm228 = vcmp.lt.s32.totalorder %v227, 2
    %vm229 = vcmp.eq.s32.totalorder %v227, 0
    %v230 = vxor.u32 %v225, 2147483648
    %v231 = vsel %vm229, %v224, %v230
    %vm232 = vcmp.eq.s32.totalorder %v227, 2
    %v233 = vxor.u32 %v224, 2147483648
    %v234 = vsel %vm232, %v233, %v225
    %v235 = vsel %vm228, %v231, %v234
    %v236 = vsel %vm226, nan, %v235
    %237 = vst [vmem:[#allocation5] sm:$0xff] %v133
    %238 = vst [vmem:[#allocation5 + $0x8] sm:$0xff] %v236
    // Predicated region
    $region10: #{tpu_custom_call.1} parent=1 // pred_check
      _
    $region11: #{tpu_custom_call.1} parent=1 // pred_check_branch
      %240 = sbr.rel (0) target = $region13
    $region12: #{tpu_custom_call.1} parent=1 // pred_region
      %s242 = ssub.s32 256, 256
      %243 = vsyncadd [#allocation4], %s242
      %s245 = sshll.u32 [#allocation5], 4
      %s246 = int_to_ptr.vmem [resolvable:$true] %s245
      %248 = dma.vmem_to_hbm [thread:$0]  %s246, 256, %s1, [#allocation4]
    $region13: #{tpu_custom_call.1} parent=1 // pred_fallthru
      _
    // Predicated region
    $region14: #{tpu_custom_call.1} parent=1 // pred_check
      _
    $region15: #{tpu_custom_call.1} parent=1 // pred_check_branch
      %250 = sbr.rel (0) target = $region17
    $region16: #{tpu_custom_call.1} parent=1 // pred_region
      %251 = dma.done [#allocation4], 256
    $region17: #{tpu_custom_call.1} parent=1 // pred_fallthru
      _
    %252 = vsyncpa [#allocation3], 1
    %253 = vsyncpa [#allocation4], 1

</llo_original>
